<compile_context>
chip_gen: v7x
topology: tpu7x:2x2x1
jax: 0.10.0
libtpu: 0.0.40
codegen_flags: <defaults>
</compile_context>

<pallas_src>
import functools
from typing import NamedTuple

import jax
import jax.numpy as jnp
from jax.experimental import pallas as pl
from jax.experimental.pallas import tpu as pltpu


def _round_up(x, m):
    return ((x + m - 1) // m) * m


class FFNParams(NamedTuple):
    w1: jax.Array  # (D, H)  compute dtype
    b1: jax.Array  # (1, H)  f32
    w2: jax.Array  # (H, D)  compute dtype, LN gamma folded in
    b2: jax.Array  # (1, D)  f32, beta @ w2 + b2 folded in


def prepare_ffn_params(w1, b1, gamma, beta, w2, b2, *, compute_dtype=jnp.bfloat16):
    """One-time weight prep: fold LayerNorm affine into the second linear, cast weights.

    Weights are stored (in_features, out_features), i.e. already transposed vs. torch.
    """
    D, H = w1.shape
    w1f = w1.astype(jnp.float32)
    w2f = w2.astype(jnp.float32)
    gammaf = gamma.astype(jnp.float32)
    betaf = beta.astype(jnp.float32)
    # Fold in f32 BEFORE casting so the fold adds no extra low-precision rounding.
    w2_folded = gammaf[:, None] * w2f
    b2_folded = (betaf @ w2f + b2.astype(jnp.float32)).reshape(1, D)
    return FFNParams(
        w1=w1f.astype(compute_dtype),
        b1=b1.reshape(1, H).astype(jnp.float32),
        w2=w2_folded.astype(compute_dtype),
        b2=b2_folded,
    )


def _ffn_kernel(x_ref, w1_ref, b1_ref, w2_ref, b2_ref, o_ref, *, eps, compute_dtype):
    # x_ref: (tm, D)   w1_ref: (D, H)   b1: (1, H)   w2_ref: (H, D)   b2: (1, D)
    # Linear(D -> 2D): compute-dtype MXU matmul, f32 accumulation.
    h = jnp.dot(x_ref[...].astype(compute_dtype), w1_ref[...],
                preferred_element_type=jnp.float32) + b1_ref[...]

    # SiLU in f32 (sigmoid's exp lands on the EUP slot).
    h = h * jax.nn.sigmoid(h)

    # LayerNorm stats as E[h] and E[h^2] - mean^2: two independent lane reductions.
    mean = jnp.mean(h, axis=-1, keepdims=True)
    mean_sq = jnp.mean(h * h, axis=-1, keepdims=True)
    var = mean_sq - mean * mean
    hn = (h - mean) * jax.lax.rsqrt(var + eps)
    # (gamma/beta already folded into w2/b2 at prep time)

    # Linear(2D -> D) + residual. Residual re-reads x_ref here (no long f32 live-range).
    y = jnp.dot(hn.astype(compute_dtype), w2_ref[...],
                preferred_element_type=jnp.float32) + b2_ref[...]
    o_ref[...] = (y + x_ref[...].astype(jnp.float32)).astype(o_ref.dtype)


def _vmem_budget_bytes():
    """Generation-aware scoped-VMEM budget (~85% of physical, with a sane fallback)."""
    try:
        cap = int(pltpu.get_tpu_info().vmem_capacity_bytes)
    except Exception:  # capability probe only; not hiding kernel bugs
        cap = 64 * 1024 * 1024
    return max(16 * 1024 * 1024, int(cap * 0.85))


def _choose_row_tile(M, D, H, compute_dtype, vmem_budget, *, requested_tm=None,
                     weight_buffers=1):
    """Pick the row tile from the actual VMEM budget.

    Per-row f32 cost: x + out double-buffered (16*D) + h/hn intermediates (8*H).
    Resident weights: (D*H + H*D) * itemsize * weight_buffers.
    """
    w_itemsize = jnp.dtype(compute_dtype).itemsize
    resident = weight_buffers * (2 * D * H * w_itemsize + (H + D) * 4)
    avail = vmem_budget - resident - (4 << 20)  # headroom for compiler scratch
    per_row = 16 * D + 8 * H
    cap = max(8, (avail // per_row) // 8 * 8) if avail > per_row * 8 else 8

    if requested_tm is None:
        requested_tm = 1024 if D <= 512 else 512
    tm = min(_round_up(requested_tm, 8), cap, _round_up(M, 8))
    # Keep the grid at >= 2 steps so dual-TensorCore chips (v7x) don't idle one core.
    if M > 8:
        tm = min(tm, _round_up((M + 1) // 2, 8))
    return max(tm, 8)


def _build_ffn_call(M_pad, D, H, out_dtype, tm, eps, compute_dtype,
                    single_buffer_weights, vmem_limit_bytes):
    if single_buffer_weights:
        # Grid-invariant operands: no point double-buffering them.
        const_kwargs = dict(pipeline_mode=pl.Buffered(buffer_count=1))
    else:
        const_kwargs = {}

    def const_spec(shape):
        return pl.BlockSpec(shape, lambda i: (0, 0), **const_kwargs)

    w_bytes = jnp.dtype(compute_dtype).itemsize
    flops = int(4 * M_pad * D * H)            # two matmuls (mul + add each)
    transcendentals = int(M_pad * H)          # sigmoid exp
    bytes_accessed = int(2 * M_pad * D * 4    # x in + out (f32)
                         + 2 * D * H * w_bytes
                         + (H + D) * 4)       # biases

    return pl.pallas_call(
        functools.partial(_ffn_kernel, eps=eps, compute_dtype=compute_dtype),
        out_shape=jax.ShapeDtypeStruct((M_pad, D), out_dtype),
        grid_spec=pltpu.PrefetchScalarGridSpec(
            num_scalar_prefetch=0,
            grid=(M_pad // tm,),
            in_specs=[
                pl.BlockSpec((tm, D), lambda i: (i, 0)),  # x tile (double-buffered)
                const_spec((D, H)),                       # w1 (resident)
                const_spec((1, H)),                       # b1
                const_spec((H, D)),                       # w2 (gamma folded, resident)
                const_spec((1, D)),                       # b2 (beta@w2 folded)
            ],
            out_specs=pl.BlockSpec((tm, D), lambda i: (i, 0)),
        ),
        compiler_params=pltpu.CompilerParams(
            dimension_semantics=("parallel",),            # shard M across TCs on v7x
            vmem_limit_bytes=vmem_limit_bytes,
        ),
        cost_estimate=pl.CostEstimate(
            flops=flops,
            transcendentals=transcendentals,
            bytes_accessed=bytes_accessed,
        ),
    )


def _launch(x2d, params, *, eps, tm, compute_dtype, single_buffer, vmem_limit):
    M, D = x2d.shape
    H = params.w1.shape[1]
    M_pad = _round_up(M, tm)
    xp = jnp.pad(x2d, ((0, M_pad - M), (0, 0))) if M_pad != M else x2d
    call = _build_ffn_call(M_pad, D, H, x2d.dtype, tm, eps, compute_dtype,
                           single_buffer, vmem_limit)
    out = call(xp, params.w1, params.b1, params.w2, params.b2)
    return out[:M] if M_pad != M else out


# Errors that plausibly mean "single-buffered (Buffered(1)) specs are unsupported here";
# anything else (shape/dtype/genuine bugs) propagates.
_SINGLE_BUFFER_FALLBACK_ERRORS = (
    pltpu.LoweringException, NotImplementedError, ValueError, TypeError, KeyError)


def positionwise_feed_forward(x, params: FFNParams, *, eps=1e-5, tm=None):
    """x: (batch, seq, dim). params from prepare_ffn_params. Returns FFN(x) + x."""
    B, S, D = x.shape
    H = params.w1.shape[1]
    M = B * S
    compute_dtype = params.w1.dtype

    x2d = x.reshape(M, D)
    budget = _vmem_budget_bytes()

    tm1 = _choose_row_tile(M, D, H, compute_dtype, budget,
                           requested_tm=tm, weight_buffers=1)
    try:
        out = _launch(x2d, params, eps=eps, tm=tm1, compute_dtype=compute_dtype,
                      single_buffer=True, vmem_limit=budget)
    except _SINGLE_BUFFER_FALLBACK_ERRORS:
        # Re-derive tm with double-buffered weights so the fallback stays within budget.
        tm2 = _choose_row_tile(M, D, H, compute_dtype, budget,
                               requested_tm=tm, weight_buffers=2)
        out = _launch(x2d, params, eps=eps, tm=tm2, compute_dtype=compute_dtype,
                      single_buffer=False, vmem_limit=budget)

    return out.reshape(B, S, D)


def positionwise_feed_forward_raw(x, w1, b1, gamma, beta, w2, b2, *, eps=1e-5,
                                  tm=None, compute_dtype=jnp.bfloat16):
    """Convenience one-shot wrapper. For repeated calls, use prepare_ffn_params once."""
    params = prepare_ffn_params(w1, b1, gamma, beta, w2, b2, compute_dtype=compute_dtype)
    return positionwise_feed_forward(x, params, eps=eps, tm=tm)


# ---------------------------------------------------------------------------
# Reference + test harness
# ---------------------------------------------------------------------------

def _xavier_uniform(key, fan_in, fan_out, shape):
    limit = jnp.sqrt(6.0 / (fan_in + fan_out))
    return jax.random.uniform(key, shape, jnp.float32, -limit, limit)


def _reference(x, w1, b1, gamma, beta, w2, b2, eps=1e-5):
    h = x @ w1 + b1
    h = h * jax.nn.sigmoid(h)
    mean = jnp.mean(h, axis=-1, keepdims=True)
    var = jnp.mean((h - mean) ** 2, axis=-1, keepdims=True)
    hn = (h - mean) / jnp.sqrt(var + eps)
    hn = hn * gamma + beta
    return hn @ w2 + b2 + x


if __name__ == "__main__":
    key = jax.random.PRNGKey(0)
    k_x, k_w1, k_b1, k_w2, k_b2, k_g, k_be, k_x2 = jax.random.split(key, 8)

    # Primary (lane-dense) demo: dim is a multiple of 128 so output stores are unmasked.
    batch, seq, dim = 2, 8, 128
    hidden = 2 * dim

    x = jax.random.normal(k_x, (batch, seq, dim), jnp.float32)

    # nn.Linear(dim, 2*dim): xavier_uniform weight (stored (in, out)), uniform-ish bias.
    w1 = _xavier_uniform(k_w1, dim, hidden, (dim, hidden))
    b1 = jax.random.uniform(k_b1, (hidden,), jnp.float32,
                            -1.0 / jnp.sqrt(dim), 1.0 / jnp.sqrt(dim))
    # Non-trivial LayerNorm affine so the gamma/beta fold is actually exercised.
    gamma = jax.random.uniform(k_g, (hidden,), jnp.float32, 0.5, 1.5)
    beta = 0.1 * jax.random.normal(k_be, (hidden,), jnp.float32)
    # nn.Linear(2*dim, dim)
    w2 = _xavier_uniform(k_w2, hidden, dim, (hidden, dim))
    b2 = jax.random.uniform(k_b2, (dim,), jnp.float32,
                            -1.0 / jnp.sqrt(hidden), 1.0 / jnp.sqrt(hidden))

    ref = _reference(x, w1, b1, gamma, beta, w2, b2)

    # f32 compute path: matches the reference tightly (also validates the affine fold).
    params_f32 = prepare_ffn_params(w1, b1, gamma, beta, w2, b2,
                                    compute_dtype=jnp.float32)
    out_f32 = jax.block_until_ready(positionwise_feed_forward(x, params_f32))
    assert out_f32.shape == x.shape
    assert jnp.allclose(out_f32, ref, atol=1e-4, rtol=1e-4), \
        "f32 kernel mismatch vs reference"

    # Default bf16-matmul path (f32 accumulation): looser tolerance from bf16 rounding.
    params_bf16 = prepare_ffn_params(w1, b1, gamma, beta, w2, b2,
                                     compute_dtype=jnp.bfloat16)
    out_bf16 = jax.block_until_ready(positionwise_feed_forward(x, params_bf16))
    max_err = jnp.max(jnp.abs(out_bf16 - ref))
    assert max_err < 5e-2, f"bf16 kernel mismatch vs reference (max abs err {max_err})"

    # Ragged / non-lane-dense case: exercises M-padding (M=18 not a tile multiple) and
    # dim not a multiple of 128 (masked stores, still correct), via the one-shot wrapper.
    b2_, s2_, d2_ = 2, 9, 32
    h2_ = 2 * d2_
    x_s = jax.random.normal(k_x2, (b2_, s2_, d2_), jnp.float32)
    w1_s = _xavier_uniform(k_w1, d2_, h2_, (d2_, h2_))
    b1_s = jax.random.uniform(k_b1, (h2_,), jnp.float32, -0.1, 0.1)
    g_s = jax.random.uniform(k_g, (h2_,), jnp.float32, 0.5, 1.5)
    be_s = 0.1 * jax.random.normal(k_be, (h2_,), jnp.float32)
    w2_s = _xavier_uniform(k_w2, h2_, d2_, (h2_, d2_))
    b2_s = jax.random.uniform(k_b2, (d2_,), jnp.float32, -0.1, 0.1)

    out_s = positionwise_feed_forward_raw(x_s, w1_s, b1_s, g_s, be_s, w2_s, b2_s,
                                          compute_dtype=jnp.float32)
    out_s = jax.block_until_ready(out_s)
    ref_s = _reference(x_s, w1_s, b1_s, g_s, be_s, w2_s, b2_s)
    assert jnp.allclose(out_s, ref_s, atol=1e-4, rtol=1e-4), \
        "padded-case mismatch vs reference"

    print("KERNEL_OK")
</pallas_src>

<mosaic_0001>
module attributes {stable_mosaic.version = 11 : i64} {
  func.func @_ffn_kernel(%arg0: i32, %arg1: memref<8x128xf32, #tpu.memory_space<vmem>>, %arg2: memref<128x256xf32, #tpu.memory_space<vmem>>, %arg3: memref<1x256xf32, #tpu.memory_space<vmem>>, %arg4: memref<256x128xf32, #tpu.memory_space<vmem>>, %arg5: memref<1x128xf32, #tpu.memory_space<vmem>>, %arg6: memref<8x128xf32, #tpu.memory_space<vmem>>) attributes {dimension_semantics = [#tpu.dimension_semantics<parallel>], iteration_bounds = array<i64: 2>, scalar_prefetch = 0 : i64, scratch_operands = 0 : i64, tpu.core_type = #tpu.core_type<tc>, window_params = [{transform_indices = @transform_0, window_bounds = array<i64: 8, 128>}, {pipeline_mode = #tpu.pipeline_mode<synchronous>, transform_indices = @transform_1, window_bounds = array<i64: 128, 256>}, {pipeline_mode = #tpu.pipeline_mode<synchronous>, transform_indices = @transform_2, window_bounds = array<i64: 1, 256>}, {pipeline_mode = #tpu.pipeline_mode<synchronous>, transform_indices = @transform_3, window_bounds = array<i64: 256, 128>}, {pipeline_mode = #tpu.pipeline_mode<synchronous>, transform_indices = @transform_4, window_bounds = array<i64: 1, 128>}, {transform_indices = @transform_5, window_bounds = array<i64: 8, 128>}]} {
    %c0 = arith.constant 0 : index
    %c0_0 = arith.constant 0 : index
    %0 = vector.load %arg1[%c0, %c0_0] : memref<8x128xf32, #tpu.memory_space<vmem>>, vector<8x128xf32>
    %c0_1 = arith.constant 0 : index
    %c0_2 = arith.constant 0 : index
    %1 = vector.load %arg2[%c0_1, %c0_2] : memref<128x256xf32, #tpu.memory_space<vmem>>, vector<128x256xf32>
    %cst = arith.constant dense<0.000000e+00> : vector<8x256xf32>
    %2 = tpu.matmul %0, %1, %cst {dimension_numbers = #tpu.dot_dimension_numbers<[1], [0], [0], [1], [0, 0, 1, 1], [], []>} : vector<8x128xf32>, vector<128x256xf32>, vector<8x256xf32> -> vector<8x256xf32>
    %c0_3 = arith.constant 0 : index
    %c0_4 = arith.constant 0 : index
    %3 = vector.load %arg3[%c0_3, %c0_4] : memref<1x256xf32, #tpu.memory_space<vmem>>, vector<1x256xf32>
    %4 = vector.broadcast %3 : vector<1x256xf32> to vector<8x256xf32>
    %5 = arith.addf %2, %4 : vector<8x256xf32>
    %6 = arith.negf %5 : vector<8x256xf32>
    %7 = math.exp %6 : vector<8x256xf32>
    %cst_5 = arith.constant 1.000000e+00 : f32
    %8 = vector.broadcast %cst_5 : f32 to vector<8x256xf32>
    %9 = arith.addf %8, %7 : vector<8x256xf32>
    %10 = arith.divf %8, %9 : vector<8x256xf32>
    %11 = arith.mulf %5, %10 : vector<8x256xf32>
    %cst_6 = arith.constant dense<0.000000e+00> : vector<8xf32>
    %12 = vector.multi_reduction <add>, %11, %cst_6 [1] : vector<8x256xf32> to vector<8xf32>
    %13 = vector.shape_cast %12 : vector<8xf32> to vector<8x1xf32>
    %cst_7 = arith.constant 2.560000e+02 : f32
    %14 = vector.broadcast %cst_7 : f32 to vector<8x1xf32>
    %15 = arith.divf %13, %14 : vector<8x1xf32>
    %16 = arith.mulf %11, %11 : vector<8x256xf32>
    %cst_8 = arith.constant dense<0.000000e+00> : vector<8xf32>
    %17 = vector.multi_reduction <add>, %16, %cst_8 [1] : vector<8x256xf32> to vector<8xf32>
    %18 = vector.shape_cast %17 : vector<8xf32> to vector<8x1xf32>
    %cst_9 = arith.constant 2.560000e+02 : f32
    %19 = vector.broadcast %cst_9 : f32 to vector<8x1xf32>
    %20 = arith.divf %18, %19 : vector<8x1xf32>
    %21 = arith.mulf %15, %15 : vector<8x1xf32>
    %22 = arith.subf %20, %21 : vector<8x1xf32>
    %23 = vector.broadcast %15 : vector<8x1xf32> to vector<8x256xf32>
    %24 = arith.subf %11, %23 : vector<8x256xf32>
    %cst_10 = arith.constant 9.99999974E-6 : f32
    %25 = vector.broadcast %cst_10 : f32 to vector<8x1xf32>
    %26 = arith.addf %22, %25 : vector<8x1xf32>
    %27 = math.rsqrt %26 : vector<8x1xf32>
    %28 = vector.broadcast %27 : vector<8x1xf32> to vector<8x256xf32>
    %29 = arith.mulf %24, %28 : vector<8x256xf32>
    %c0_11 = arith.constant 0 : index
    %c0_12 = arith.constant 0 : index
    %30 = vector.load %arg4[%c0_11, %c0_12] : memref<256x128xf32, #tpu.memory_space<vmem>>, vector<256x128xf32>
    %cst_13 = arith.constant dense<0.000000e+00> : vector<8x128xf32>
    %31 = tpu.matmul %29, %30, %cst_13 {dimension_numbers = #tpu.dot_dimension_numbers<[1], [0], [0], [1], [0, 0, 1, 1], [], []>} : vector<8x256xf32>, vector<256x128xf32>, vector<8x128xf32> -> vector<8x128xf32>
    %c0_14 = arith.constant 0 : index
    %c0_15 = arith.constant 0 : index
    %32 = vector.load %arg5[%c0_14, %c0_15] : memref<1x128xf32, #tpu.memory_space<vmem>>, vector<1x128xf32>
    %33 = vector.broadcast %32 : vector<1x128xf32> to vector<8x128xf32>
    %34 = arith.addf %31, %33 : vector<8x128xf32>
    %c0_16 = arith.constant 0 : index
    %c0_17 = arith.constant 0 : index
    %35 = vector.load %arg1[%c0_16, %c0_17] : memref<8x128xf32, #tpu.memory_space<vmem>>, vector<8x128xf32>
    %36 = arith.addf %34, %35 : vector<8x128xf32>
    %c0_18 = arith.constant 0 : index
    %c0_19 = arith.constant 0 : index
    %37 = vector.load %arg6[%c0_18, %c0_19] : memref<8x128xf32, #tpu.memory_space<vmem>>, vector<8x128xf32>
    tpu.vector_store %arg6[%c0_18, %c0_19], %36 {strides = array<i32>} : memref<8x128xf32, #tpu.memory_space<vmem>>, vector<8x128xf32>,
    return
  }
  func.func @transform_0(%arg0: i32) -> (i32, i32) {
    %c0_i32 = arith.constant 0 : i32
    %c0_i32_0 = arith.constant 0 : i32
    return %arg0, %c0_i32 : i32, i32
  }
  func.func @transform_1(%arg0: i32) -> (i32, i32) {
    %c0_i32 = arith.constant 0 : i32
    %c0_i32_0 = arith.constant 0 : i32
    %c0_i32_1 = arith.constant 0 : i32
    return %c0_i32, %c0_i32_0 : i32, i32
  }
  func.func @transform_2(%arg0: i32) -> (i32, i32) {
    %c0_i32 = arith.constant 0 : i32
    %c0_i32_0 = arith.constant 0 : i32
    %c0_i32_1 = arith.constant 0 : i32
    return %c0_i32, %c0_i32_0 : i32, i32
  }
  func.func @transform_3(%arg0: i32) -> (i32, i32) {
    %c0_i32 = arith.constant 0 : i32
    %c0_i32_0 = arith.constant 0 : i32
    %c0_i32_1 = arith.constant 0 : i32
    return %c0_i32, %c0_i32_0 : i32, i32
  }
  func.func @transform_4(%arg0: i32) -> (i32, i32) {
    %c0_i32 = arith.constant 0 : i32
    %c0_i32_0 = arith.constant 0 : i32
    %c0_i32_1 = arith.constant 0 : i32
    return %c0_i32, %c0_i32_0 : i32, i32
  }
  func.func @transform_5(%arg0: i32) -> (i32, i32) {
    %c0_i32 = arith.constant 0 : i32
    %c0_i32_0 = arith.constant 0 : i32
    return %arg0, %c0_i32 : i32, i32
  }
}

</mosaic_0001>

<llo_original>
// kernel: tpu_custom_call.1
$region0: #{tpu_custom_call.1}
  #allocation0 [shape = 'u32[]', space=smem, size = 0x4, offset = 0x4, fixed_abs, tag = 'smem constant byte address 0x4 - core index']
  #allocation1 [shape = 'u32[144,128]{1,0:T(1,128)}', space=vmem, size = 0x12000, scoped, tag = 'internal scratch']
  %s0 = inlined_call_operand.hbm [shape: f32[16,128], index: 0, kind: input, shape index: {}]
  %s1 = inlined_call_operand.hbm [shape: f32[128,256], index: 1, kind: input, shape index: {}]
  %s2 = inlined_call_operand.vmem [shape: f32[1,256], index: 2, kind: input, shape index: {}]
  %s3 = inlined_call_operand.hbm [shape: f32[256,128], index: 3, kind: input, shape index: {}]
  %s4 = inlined_call_operand.vmem [shape: f32[1,128], index: 4, kind: input, shape index: {}]
  %s5 = inlined_call_operand.hbm [shape: f32[16,128], index: 5, kind: output, shape index: {}]
  %s6 = sld [smem:[#allocation0]]
  $region65: #{tpu_custom_call.1} parent=0
    _
  %s8 = ssub.s32 1, %s6
  %s9 = scalar_select 0, %s8, %s6
  $region1: #{tpu_custom_call.1} parent=0
    #allocation2 [shape = 'u8[8192]{0}', space=vmem, size = 0x2000, scoped, tag = 'input window, operand 0']
    #allocation3 [shape = 's32[2]{0}', space=sflag, size = 0x8, scoped, tag = 'scoped memory for tpu_custom_call.1']
    #allocation4 [shape = 's32[2]{0}', space=sflag, size = 0x8, scoped, tag = 'scoped memory for tpu_custom_call.1']
    #allocation5 [shape = 'u8[131072]{0}', space=vmem, size = 0x20000, scoped, tag = 'input window, operand 1, single buffered']
    #allocation6 [shape = 's32[1]{0}', space=sflag, size = 0x4, scoped, tag = 'scoped memory for tpu_custom_call.1']
    #allocation7 [shape = 'u8[131072]{0}', space=vmem, size = 0x20000, scoped, tag = 'input window, operand 3, single buffered']
    #allocation8 [shape = 'u8[8192]{0}', space=vmem, size = 0x2000, scoped, tag = 'output window, operand 0']
    %10 = vsyncpa [#allocation3], 0
    %s11 = scalar_lea.sflag [#allocation3], 1
    %12 = vsyncpa %s11, 0
    %13 = vsyncpa [#allocation6], 0
    %14 = vsyncpa [#allocation4], 0
    %s15 = scalar_lea.sflag [#allocation4], 1
    %16 = vsyncpa %s15, 0
    loop: start=0, step=1, limit=4
    $region2: #{tpu_custom_call.1} parent=1 // loop_pre_header
      _
    $region3: #{tpu_custom_call.1} parent=1 // loop_header
      %s18 = sphi 0, %s22
      %p19 = scmp.ge.s32.totalorder %s18, 4
      %s28 = sphi 0, %s30
      %s31 = sphi 0, %s28
      %s32 = sphi 0, %s31
      %s48 = sphi 0, %s32
      %s52 = sphi 0, %s52
      %s54 = sphi 0, %s52
      %s55 = sphi 0, %s54
      %s69 = sphi 0, %s55
      %s73 = sphi 0, %s73
      %s75 = sphi 0, %s73
      %s76 = sphi 0, %s75
      %s90 = sphi 0, %s76
      %s94 = sphi 0, %s94
      %s96 = sphi 0, %s94
      %s97 = sphi 0, %s96
      %s111 = sphi 0, %s97
      %s115 = sphi 0, %s115
      %s117 = sphi 0, %s115
      %s118 = sphi 0, %s117
      %s132 = sphi 0, %s118
      %s138 = sphi 0, %s140
      %s141 = sphi 0, %s138
      %s142 = sphi 0, %s141
      %s158 = sphi 0, %s142
    $region4: #{tpu_custom_call.1} parent=1 // loop_header_branch
      %21 = sbr.rel (%p19) target = $region8
    $region5: #{tpu_custom_call.1} parent=1 // loop_body
      %s23 = ssub.s32 %s18, 1
      %s24 = ssub.s32 %s18, 2
      %s25 = sadd.s32 %s18, 1
      %s26 = ssub.s32 %s18, %s25
      %p27 = scmp.eq.s32.totalorder %s26, 0
      %s29 = sadd.s32 %s28, 1
      %s30 = scalar_select %p27, %s28, %s29
      %p33 = pneg %p27
      %p34 = scmp.eq.s32.totalorder %s18, 1
      %p35 = por %p33, %p34
      %p36 = scmp.ne.s32.totalorder %s28, %s31
      %p37 = scmp.eq.s32.totalorder %s18, 0
      %p38 = por %p36, %p37
      %p39 = scmp.ne.s32.totalorder %s28, %s31
      %p40 = scmp.eq.s32.totalorder %s23, 1
      %p41 = por %p39, %p40
      %p42 = scmp.ne.s32.totalorder %s31, %s32
      %p43 = scmp.eq.s32.totalorder %s23, 0
      %p44 = por %p42, %p43
      %p45 = scmp.ne.s32.totalorder %s31, %s32
      %p46 = scmp.eq.s32.totalorder %s24, 1
      %p47 = por %p45, %p46
      %p49 = scmp.ne.s32.totalorder %s32, %s48
      %p50 = scmp.eq.s32.totalorder %s24, 0
      %p51 = por %p49, %p50
      %s53 = sadd.s32 %s52, 1
      %p56 = scmp.eq.s32.totalorder %s18, 1
      %p57 = scmp.ne.s32.totalorder %s52, %s54
      %p58 = scmp.eq.s32.totalorder %s18, 0
      %p59 = por %p57, %p58
      %p60 = scmp.ne.s32.totalorder %s52, %s54
      %p61 = scmp.eq.s32.totalorder %s23, 1
      %p62 = por %p60, %p61
      %p63 = scmp.ne.s32.totalorder %s54, %s55
      %p64 = scmp.eq.s32.totalorder %s23, 0
      %p65 = por %p63, %p64
      %p66 = scmp.ne.s32.totalorder %s54, %s55
      %p67 = scmp.eq.s32.totalorder %s24, 1
      %p68 = por %p66, %p67
      %p70 = scmp.ne.s32.totalorder %s55, %s69
      %p71 = scmp.eq.s32.totalorder %s24, 0
      %p72 = por %p70, %p71
      %s74 = sadd.s32 %s73, 1
      %p77 = scmp.eq.s32.totalorder %s18, 1
      %p78 = scmp.ne.s32.totalorder %s73, %s75
      %p79 = scmp.eq.s32.totalorder %s18, 0
      %p80 = por %p78, %p79
      %p81 = scmp.ne.s32.totalorder %s73, %s75
      %p82 = scmp.eq.s32.totalorder %s23, 1
      %p83 = por %p81, %p82
      %p84 = scmp.ne.s32.totalorder %s75, %s76
      %p85 = scmp.eq.s32.totalorder %s23, 0
      %p86 = por %p84, %p85
      %p87 = scmp.ne.s32.totalorder %s75, %s76
      %p88 = scmp.eq.s32.totalorder %s24, 1
      %p89 = por %p87, %p88
      %p91 = scmp.ne.s32.totalorder %s76, %s90
      %p92 = scmp.eq.s32.totalorder %s24, 0
      %p93 = por %p91, %p92
      %s95 = sadd.s32 %s94, 1
      %p98 = scmp.eq.s32.totalorder %s18, 1
      %p99 = scmp.ne.s32.totalorder %s94, %s96
      %p100 = scmp.eq.s32.totalorder %s18, 0
      %p101 = por %p99, %p100
      %p102 = scmp.ne.s32.totalorder %s94, %s96
      %p103 = scmp.eq.s32.totalorder %s23, 1
      %p104 = por %p102, %p103
      %p105 = scmp.ne.s32.totalorder %s96, %s97
      %p106 = scmp.eq.s32.totalorder %s23, 0
      %p107 = por %p105, %p106
      %p108 = scmp.ne.s32.totalorder %s96, %s97
      %p109 = scmp.eq.s32.totalorder %s24, 1
      %p110 = por %p108, %p109
      %p112 = scmp.ne.s32.totalorder %s97, %s111
      %p113 = scmp.eq.s32.totalorder %s24, 0
      %p114 = por %p112, %p113
      %s116 = sadd.s32 %s115, 1
      %p119 = scmp.eq.s32.totalorder %s18, 1
      %p120 = scmp.ne.s32.totalorder %s115, %s117
      %p121 = scmp.eq.s32.totalorder %s18, 0
      %p122 = por %p120, %p121
      %p123 = scmp.ne.s32.totalorder %s115, %s117
      %p124 = scmp.eq.s32.totalorder %s23, 1
      %p125 = por %p123, %p124
      %p126 = scmp.ne.s32.totalorder %s117, %s118
      %p127 = scmp.eq.s32.totalorder %s23, 0
      %p128 = por %p126, %p127
      %p129 = scmp.ne.s32.totalorder %s117, %s118
      %p130 = scmp.eq.s32.totalorder %s24, 1
      %p131 = por %p129, %p130
      %p133 = scmp.ne.s32.totalorder %s118, %s132
      %p134 = scmp.eq.s32.totalorder %s24, 0
      %p135 = por %p133, %p134
      %s136 = ssub.s32 %s18, %s25
      %p137 = scmp.eq.s32.totalorder %s136, 0
      %s139 = sadd.s32 %s138, 1
      %s140 = scalar_select %p137, %s138, %s139
      %p143 = pneg %p137
      %p144 = scmp.eq.s32.totalorder %s18, 1
      %p145 = por %p143, %p144
      %p146 = scmp.ne.s32.totalorder %s138, %s141
      %p147 = scmp.eq.s32.totalorder %s18, 0
      %p148 = por %p146, %p147
      %p149 = scmp.ne.s32.totalorder %s138, %s141
      %p150 = scmp.eq.s32.totalorder %s23, 1
      %p151 = por %p149, %p150
      %p152 = scmp.ne.s32.totalorder %s141, %s142
      %p153 = scmp.eq.s32.totalorder %s23, 0
      %p154 = por %p152, %p153
      %p155 = scmp.ne.s32.totalorder %s141, %s142
      %p156 = scmp.eq.s32.totalorder %s24, 1
      %p157 = por %p155, %p156
      %p159 = scmp.ne.s32.totalorder %s142, %s158
      %p160 = scmp.eq.s32.totalorder %s24, 0
      %p161 = por %p159, %p160
      %p162 = scmp.le.s32.totalorder 1, %s18
      %p163 = scmp.lt.s32.totalorder %s18, 3
      %p164 = pnand %p162, %p163
      %p165 = pneg %p164
      // Predicated region
      $region9: #{tpu_custom_call.1} parent=5 // pred_check
        _
      $region10: #{tpu_custom_call.1} parent=5 // pred_check_branch
        %167 = sbr.rel (%p164) target = $region12
      $region11: #{tpu_custom_call.1} parent=5 // pred_region
        %s168 = ssub.s32 %s18, 1
        // Predicated region
        $region13: #{tpu_custom_call.1} parent=11 // pred_check
          %p169 = pneg %p65
        $region14: #{tpu_custom_call.1} parent=11 // pred_check_branch
          %171 = sbr.rel (%p169) target = $region16
        $region15: #{tpu_custom_call.1} parent=11 // pred_region
          %s173 = ssub.s32 4096, 4096
          %174 = vsyncadd [#allocation6], %s173
          %s175 = sshll.u32 [#allocation5], 4
          %s176 = int_to_ptr.vmem [resolvable:$true] %s175
          %181 = dma.hbm_to_vmem [thread:$0]  %s1, 4096, %s176, [#allocation6], 256, 256, 16
        $region16: #{tpu_custom_call.1} parent=11 // pred_fallthru
          _
        // Predicated region
        $region17: #{tpu_custom_call.1} parent=11 // pred_check
          %p182 = pneg %p86
        $region18: #{tpu_custom_call.1} parent=11 // pred_check_branch
          %184 = sbr.rel (%p182) target = $region20
        $region19: #{tpu_custom_call.1} parent=11 // pred_region
          _
        $region20: #{tpu_custom_call.1} parent=11 // pred_fallthru
          _
        // Predicated region
        $region21: #{tpu_custom_call.1} parent=11 // pred_check
          %p185 = pneg %p107
        $region22: #{tpu_custom_call.1} parent=11 // pred_check_branch
          %187 = sbr.rel (%p185) target = $region24
        $region23: #{tpu_custom_call.1} parent=11 // pred_region
          %s189 = ssub.s32 4096, 4096
          %190 = vsyncadd [#allocation6], %s189
          %s191 = sshll.u32 [#allocation7], 4
          %s192 = int_to_ptr.vmem [resolvable:$true] %s191
          %197 = dma.hbm_to_vmem [thread:$0]  %s3, 4096, %s192, [#allocation6], 128, 128, 8
        $region24: #{tpu_custom_call.1} parent=11 // pred_fallthru
          _
        // Predicated region
        $region25: #{tpu_custom_call.1} parent=11 // pred_check
          %p198 = pneg %p128
        $region26: #{tpu_custom_call.1} parent=11 // pred_check_branch
          %200 = sbr.rel (%p198) target = $region28
        $region27: #{tpu_custom_call.1} parent=11 // pred_region
          _
        $region28: #{tpu_custom_call.1} parent=11 // pred_fallthru
          _
      $region12: #{tpu_custom_call.1} parent=5 // pred_fallthru
        _
      %p201 = scmp.lt.s32.totalorder %s18, 2
      // Predicated region
      $region29: #{tpu_custom_call.1} parent=5 // pred_check
        %p202 = pneg %p201
      $region30: #{tpu_custom_call.1} parent=5 // pred_check_branch
        %204 = sbr.rel (%p202) target = $region32
      $region31: #{tpu_custom_call.1} parent=5 // pred_region
        // Predicated region
        $region33: #{tpu_custom_call.1} parent=31 // pred_check
          %p205 = pneg %p38
        $region34: #{tpu_custom_call.1} parent=31 // pred_check_branch
          %207 = sbr.rel (%p205) target = $region36
        $region35: #{tpu_custom_call.1} parent=31 // pred_region
          %s208 = sand.u32 %s28, 1
          %s209 = scalar_lea.sflag [#allocation3], %s208
          %s210 = sand.u32 %s28, 1
          %s211 = smul.addr %s210, 8
          %s212 = scalar_lea.vmem [#allocation2], %s211
          %s214 = ssub.s32 128, 128
          %215 = vsyncadd %s209, %s214
          %s216 = smul.addr %s18, 128
          %s217 = scalar_lea.hbm %s0, %s216
          %s219 = sshll.u32 %s212, 4
          %s220 = int_to_ptr.vmem [resolvable:$true] %s219
          %222 = dma.hbm_to_vmem [thread:$0]  %s217, 128, %s220, %s209
        $region36: #{tpu_custom_call.1} parent=31 // pred_fallthru
          _
      $region32: #{tpu_custom_call.1} parent=5 // pred_fallthru
        _
      %p223 = scmp.le.s32.totalorder 1, %s18
      %p224 = scmp.lt.s32.totalorder %s18, 3
      %p225 = pnand %p223, %p224
      %p226 = pneg %p225
      // Predicated region
      $region37: #{tpu_custom_call.1} parent=5 // pred_check
        _
      $region38: #{tpu_custom_call.1} parent=5 // pred_check_branch
        %228 = sbr.rel (%p225) target = $region40
      $region39: #{tpu_custom_call.1} parent=5 // pred_region
        %s229 = ssub.s32 %s18, 1
        %s230 = sand.u32 %s31, 1
        %s231 = scalar_lea.sflag [#allocation3], %s230
        %s232 = sand.u32 %s31, 1
        %s233 = smul.addr %s232, 8
        %s234 = scalar_lea.vmem [#allocation2], %s233
        // Predicated region
        $region41: #{tpu_custom_call.1} parent=39 // pred_check
          %p235 = pneg %p44
        $region42: #{tpu_custom_call.1} parent=39 // pred_check_branch
          %237 = sbr.rel (%p235) target = $region44
        $region43: #{tpu_custom_call.1} parent=39 // pred_region
          %238 = dma.done %s231, 128
        $region44: #{tpu_custom_call.1} parent=39 // pred_fallthru
          _
        // Predicated region
        $region45: #{tpu_custom_call.1} parent=39 // pred_check
          %p239 = pneg %p65
        $region46: #{tpu_custom_call.1} parent=39 // pred_check_branch
          %241 = sbr.rel (%p239) target = $region48
        $region47: #{tpu_custom_call.1} parent=39 // pred_region
          %242 = dma.done [#allocation6], 4096
        $region48: #{tpu_custom_call.1} parent=39 // pred_fallthru
          _
        // Predicated region
        $region49: #{tpu_custom_call.1} parent=39 // pred_check
          %p243 = pneg %p107
        $region50: #{tpu_custom_call.1} parent=39 // pred_check_branch
          %245 = sbr.rel (%p243) target = $region52
        $region51: #{tpu_custom_call.1} parent=39 // pred_region
          %246 = dma.done [#allocation6], 4096
        $region52: #{tpu_custom_call.1} parent=39 // pred_fallthru
          _
        %s247 = sand.u32 %s31, 1
        %s248 = scalar_lea.sflag [#allocation3], %s247
        %s249 = sand.u32 %s31, 1
        %s250 = smul.addr %s249, 8
        %s251 = scalar_lea.vmem [#allocation2], %s250
        %p252 = pneg %p44
        %p253 = pneg %p41
        %p254 = pneg %p65
        %p255 = pneg %p62
        %p256 = pneg %p86
        %p257 = pneg %p83
        %p258 = pneg %p107
        %p259 = pneg %p104
        %p260 = pneg %p128
        %p261 = pneg %p125
        %p262 = pneg %p154
        %p263 = pneg %p151
        %s264 = sand.u32 %s141, 1
        %s265 = scalar_lea.sflag [#allocation4], %s264
        %s266 = sand.u32 %s141, 1
        %s267 = smul.addr %s266, 8
        %s268 = scalar_lea.vmem [#allocation8], %s267
        %v269 = vld [vmem:[%s234] sm:$0xff]
        %v270 = vld [vmem:[#allocation5] sm:$0xff]
        %v271 = vld [vmem:[#allocation5 + $0x8] sm:$0xff]
        %v272 = vld [vmem:[#allocation5 + $0x10] sm:$0xff]
        %v273 = vld [vmem:[#allocation5 + $0x18] sm:$0xff]
        %v274 = vld [vmem:[#allocation5 + $0x20] sm:$0xff]
        %v275 = vld [vmem:[#allocation5 + $0x28] sm:$0xff]
        %v276 = vld [vmem:[#allocation5 + $0x30] sm:$0xff]
        %v277 = vld [vmem:[#allocation5 + $0x38] sm:$0xff]
        %v278 = vld [vmem:[#allocation5 + $0x40] sm:$0xff]
        %v279 = vld [vmem:[#allocation5 + $0x48] sm:$0xff]
        %v280 = vld [vmem:[#allocation5 + $0x50] sm:$0xff]
        %v281 = vld [vmem:[#allocation5 + $0x58] sm:$0xff]
        %v282 = vld [vmem:[#allocation5 + $0x60] sm:$0xff]
        %v283 = vld [vmem:[#allocation5 + $0x68] sm:$0xff]
        %v284 = vld [vmem:[#allocation5 + $0x70] sm:$0xff]
        %v285 = vld [vmem:[#allocation5 + $0x78] sm:$0xff]
        %v286 = vld [vmem:[#allocation5 + $0x80] sm:$0xff]
        %v287 = vld [vmem:[#allocation5 + $0x88] sm:$0xff]
        %v288 = vld [vmem:[#allocation5 + $0x90] sm:$0xff]
        %v289 = vld [vmem:[#allocation5 + $0x98] sm:$0xff]
        %v290 = vld [vmem:[#allocation5 + $0xa0] sm:$0xff]
        %v291 = vld [vmem:[#allocation5 + $0xa8] sm:$0xff]
        %v292 = vld [vmem:[#allocation5 + $0xb0] sm:$0xff]
        %v293 = vld [vmem:[#allocation5 + $0xb8] sm:$0xff]
        %v294 = vld [vmem:[#allocation5 + $0xc0] sm:$0xff]
        %v295 = vld [vmem:[#allocation5 + $0xc8] sm:$0xff]
        %v296 = vld [vmem:[#allocation5 + $0xd0] sm:$0xff]
        %v297 = vld [vmem:[#allocation5 + $0xd8] sm:$0xff]
        %v298 = vld [vmem:[#allocation5 + $0xe0] sm:$0xff]
        %v299 = vld [vmem:[#allocation5 + $0xe8] sm:$0xff]
        %v300 = vld [vmem:[#allocation5 + $0xf0] sm:$0xff]
        %v301 = vld [vmem:[#allocation5 + $0xf8] sm:$0xff]
        %v302 = vld [vmem:[%s2] sm:$0x3]
        %v304 = vlaneseq
        %v305 = vshrl.u32 %v304, 7
        %v306 = vsub.s32 0, %v305
        %v307 = vrot.slane %v302, %v306
        %v308 = vlaneseq
        %v309 = vshrl.u32 %v308, 7
        %v310 = vsub.s32 1, %v309
        %v311 = vrot.slane %v302, %v310
        %314 = vmatprep.subr.mxu0 %v271
        %315 = vmatpush1.msra.mxu0 %v270
        %316 = vmatprep.subr.mxu0 %v273
        %317 = vmatpush1.msra.mxu0 %v272
        %318 = vmatprep.subr.mxu0 %v275
        %319 = vmatpush1.msra.mxu0 %v274
        %320 = vmatprep.subr.mxu0 %v277
        %321 = vmatpush1.msra.mxu0 %v276
        %322 = vmatprep.subr.mxu0 %v279
        %323 = vmatpush1.msra.mxu0 %v278
        %324 = vmatprep.subr.mxu0 %v281
        %325 = vmatpush1.msra.mxu0 %v280
        %326 = vmatprep.subr.mxu0 %v283
        %327 = vmatpush1.msra.mxu0 %v282
        %328 = vmatprep.subr.mxu0 %v285
        %329 = vmatpush1.msra.mxu0 %v284
        %330 = vmatprep.subr.mxu0 %v287
        %331 = vmatpush1.msra.mxu0 %v286
        %332 = vmatprep.subr.mxu0 %v289
        %333 = vmatpush1.msra.mxu0 %v288
        %334 = vmatprep.subr.mxu0 %v291
        %335 = vmatpush1.msra.mxu0 %v290
        %336 = vmatprep.subr.mxu0 %v293
        %337 = vmatpush1.msra.mxu0 %v292
        %338 = vmatprep.subr.mxu0 %v295
        %339 = vmatpush1.msra.mxu0 %v294
        %340 = vmatprep.subr.mxu0 %v297
        %341 = vmatpush1.msra.mxu0 %v296
        %342 = vmatprep.subr.mxu0 %v299
        %343 = vmatpush1.msra.mxu0 %v298
        %344 = vmatprep.subr.mxu0 %v301
        %345 = vmatpush1.msra.mxu0 %v300
        %346 = vmatprep.subr.mxu0 0.0
        %347 = vmatpush1.msra.mxu0 0.0
        %348 = vmatprep.subr.mxu0 0.0
        %349 = vmatpush1.msra.mxu0 0.0
        %350 = vmatprep.subr.mxu0 0.0
        %351 = vmatpush1.msra.mxu0 0.0
        %352 = vmatprep.subr.mxu0 0.0
        %353 = vmatpush1.msra.mxu0 0.0
        %354 = vmatprep.subr.mxu0 0.0
        %355 = vmatpush1.msra.mxu0 0.0
        %356 = vmatprep.subr.mxu0 0.0
        %357 = vmatpush1.msra.mxu0 0.0
        %358 = vmatprep.subr.mxu0 0.0
        %359 = vmatpush1.msra.mxu0 0.0
        %360 = vmatprep.subr.mxu0 0.0
        %361 = vmatpush1.msra.mxu0 0.0
        %362 = vmatprep.subr.mxu0 0.0
        %363 = vmatpush1.msra.mxu0 0.0
        %364 = vmatprep.subr.mxu0 0.0
        %365 = vmatpush1.msra.mxu0 0.0
        %366 = vmatprep.subr.mxu0 0.0
        %367 = vmatpush1.msra.mxu0 0.0
        %368 = vmatprep.subr.mxu0 0.0
        %369 = vmatpush1.msra.mxu0 0.0
        %370 = vmatprep.subr.mxu0 0.0
        %371 = vmatpush1.msra.mxu0 0.0
        %372 = vmatprep.subr.mxu0 0.0
        %373 = vmatpush1.msra.mxu0 0.0
        %374 = vmatprep.subr.mxu0 0.0
        %375 = vmatpush1.msra.mxu0 0.0
        %376 = vmatprep.subr.mxu0 0.0
        %377 = vmatpush1.msra.mxu0 0.0
        %378 = vmatprep.mubr.f32.mxu0 0.0
        %379 = vmatmul.mubr.f32.gmra.mrb[0].mxu0 %v269
        %v380 = vpop.f32.mrb[0].mxu0
        %v381 = vadd.f32 %v307, %v380
        %v382 = vpop.f32.mrb[0].mxu0
        %v383 = vadd.f32 %v311, %v382
        %384 = vdwg.mxu0
        %v385 = vxor.u32 %v381, 2147483648
        %v386 = vxor.u32 %v383, 2147483648
        %v387 = vmul.f32 %v385, 1.442695
        %v388 = vpow.pop %v387
        %v389 = vmul.f32 %v386, 1.442695
        %v390 = vpow.pop %v389
        %v391 = vadd.f32 %v388, 1.0
        %v392 = vadd.f32 %v390, 1.0
        %v393 = vrcp.pop %v391
        %v394 = vmul.f32 1.0, %v393
        %v395 = vrcp.pop %v392
        %v396 = vmul.f32 1.0, %v395
        %v397 = vmul.f32 %v381, %v394
        %v398 = vmul.f32 %v383, %v396
        %v399 = vadd.f32 %v397, %v398
        %400 = vadd.xlane.f32.xlu0 %v399
        %v401 = vpop.xlane.xlu0 %400
        %v402 = vrcp.pop 256.0
        %v403 = vmul.f32 %v401, %v402
        %v404 = vmul.f32 %v397, %v397
        %v405 = vmul.f32 %v398, %v398
        %v406 = vadd.f32 %v404, %v405
        %407 = vadd.xlane.f32.xlu0 %v406
        %v408 = vpop.xlane.xlu0 %407
        %v409 = vmul.f32 %v408, %v402
        %v410 = vmul.f32 %v403, %v403
        %v411 = vsub.f32 %v409, %v410
        %v412 = vsub.f32 %v397, %v403
        %v413 = vsub.f32 %v398, %v403
        %v414 = vadd.f32 %v411, 1e-05
        %v415 = vrsqrt.pop %v414
        %v416 = vmul.f32 %v412, %v415
        %v417 = vmul.f32 %v413, %v415
        %v418 = vld [vmem:[#allocation7] sm:$0xff]
        %v419 = vld [vmem:[#allocation7 + $0x8] sm:$0xff]
        %v420 = vld [vmem:[#allocation7 + $0x10] sm:$0xff]
        %v421 = vld [vmem:[#allocation7 + $0x18] sm:$0xff]
        %v422 = vld [vmem:[#allocation7 + $0x20] sm:$0xff]
        %v423 = vld [vmem:[#allocation7 + $0x28] sm:$0xff]
        %v424 = vld [vmem:[#allocation7 + $0x30] sm:$0xff]
        %v425 = vld [vmem:[#allocation7 + $0x38] sm:$0xff]
        %v426 = vld [vmem:[#allocation7 + $0x40] sm:$0xff]
        %v427 = vld [vmem:[#allocation7 + $0x48] sm:$0xff]
        %v428 = vld [vmem:[#allocation7 + $0x50] sm:$0xff]
        %v429 = vld [vmem:[#allocation7 + $0x58] sm:$0xff]
        %v430 = vld [vmem:[#allocation7 + $0x60] sm:$0xff]
        %v431 = vld [vmem:[#allocation7 + $0x68] sm:$0xff]
        %v432 = vld [vmem:[#allocation7 + $0x70] sm:$0xff]
        %v433 = vld [vmem:[#allocation7 + $0x78] sm:$0xff]
        %v434 = vld [vmem:[#allocation7 + $0x80] sm:$0xff]
        %v435 = vld [vmem:[#allocation7 + $0x88] sm:$0xff]
        %v436 = vld [vmem:[#allocation7 + $0x90] sm:$0xff]
        %v437 = vld [vmem:[#allocation7 + $0x98] sm:$0xff]
        %v438 = vld [vmem:[#allocation7 + $0xa0] sm:$0xff]
        %v439 = vld [vmem:[#allocation7 + $0xa8] sm:$0xff]
        %v440 = vld [vmem:[#allocation7 + $0xb0] sm:$0xff]
        %v441 = vld [vmem:[#allocation7 + $0xb8] sm:$0xff]
        %v442 = vld [vmem:[#allocation7 + $0xc0] sm:$0xff]
        %v443 = vld [vmem:[#allocation7 + $0xc8] sm:$0xff]
        %v444 = vld [vmem:[#allocation7 + $0xd0] sm:$0xff]
        %v445 = vld [vmem:[#allocation7 + $0xd8] sm:$0xff]
        %v446 = vld [vmem:[#allocation7 + $0xe0] sm:$0xff]
        %v447 = vld [vmem:[#allocation7 + $0xe8] sm:$0xff]
        %v448 = vld [vmem:[#allocation7 + $0xf0] sm:$0xff]
        %v449 = vld [vmem:[#allocation7 + $0xf8] sm:$0xff]
        %v450 = vld [vmem:[%s4] sm:$0x1]
        %v452 = vlaneseq
        %v453 = vshrl.u32 %v452, 7
        %v454 = vsub.s32 0, %v453
        %v455 = vrot.slane %v450, %v454
        %457 = vmatprep.subr.mxu0 0.0
        %458 = vmatpush1.msra.mxu0 %v418
        %459 = vmatprep.subr.mxu0 0.0
        %460 = vmatpush1.msra.mxu0 %v419
        %461 = vmatprep.subr.mxu0 0.0
        %462 = vmatpush1.msra.mxu0 %v420
        %463 = vmatprep.subr.mxu0 0.0
        %464 = vmatpush1.msra.mxu0 %v421
        %465 = vmatprep.subr.mxu0 0.0
        %466 = vmatpush1.msra.mxu0 %v422
        %467 = vmatprep.subr.mxu0 0.0
        %468 = vmatpush1.msra.mxu0 %v423
        %469 = vmatprep.subr.mxu0 0.0
        %470 = vmatpush1.msra.mxu0 %v424
        %471 = vmatprep.subr.mxu0 0.0
        %472 = vmatpush1.msra.mxu0 %v425
        %473 = vmatprep.subr.mxu0 0.0
        %474 = vmatpush1.msra.mxu0 %v426
        %475 = vmatprep.subr.mxu0 0.0
        %476 = vmatpush1.msra.mxu0 %v427
        %477 = vmatprep.subr.mxu0 0.0
        %478 = vmatpush1.msra.mxu0 %v428
        %479 = vmatprep.subr.mxu0 0.0
        %480 = vmatpush1.msra.mxu0 %v429
        %481 = vmatprep.subr.mxu0 0.0
        %482 = vmatpush1.msra.mxu0 %v430
        %483 = vmatprep.subr.mxu0 0.0
        %484 = vmatpush1.msra.mxu0 %v431
        %485 = vmatprep.subr.mxu0 0.0
        %486 = vmatpush1.msra.mxu0 %v432
        %487 = vmatprep.subr.mxu0 0.0
        %488 = vmatpush1.msra.mxu0 %v433
        %489 = vmatprep.subr.mxu0 0.0
        %490 = vmatpush1.msra.mxu0 %v434
        %491 = vmatprep.subr.mxu0 0.0
        %492 = vmatpush1.msra.mxu0 %v435
        %493 = vmatprep.subr.mxu0 0.0
        %494 = vmatpush1.msra.mxu0 %v436
        %495 = vmatprep.subr.mxu0 0.0
        %496 = vmatpush1.msra.mxu0 %v437
        %497 = vmatprep.subr.mxu0 0.0
        %498 = vmatpush1.msra.mxu0 %v438
        %499 = vmatprep.subr.mxu0 0.0
        %500 = vmatpush1.msra.mxu0 %v439
        %501 = vmatprep.subr.mxu0 0.0
        %502 = vmatpush1.msra.mxu0 %v440
        %503 = vmatprep.subr.mxu0 0.0
        %504 = vmatpush1.msra.mxu0 %v441
        %505 = vmatprep.subr.mxu0 0.0
        %506 = vmatpush1.msra.mxu0 %v442
        %507 = vmatprep.subr.mxu0 0.0
        %508 = vmatpush1.msra.mxu0 %v443
        %509 = vmatprep.subr.mxu0 0.0
        %510 = vmatpush1.msra.mxu0 %v444
        %511 = vmatprep.subr.mxu0 0.0
        %512 = vmatpush1.msra.mxu0 %v445
        %513 = vmatprep.subr.mxu0 0.0
        %514 = vmatpush1.msra.mxu0 %v446
        %515 = vmatprep.subr.mxu0 0.0
        %516 = vmatpush1.msra.mxu0 %v447
        %517 = vmatprep.subr.mxu0 0.0
        %518 = vmatpush1.msra.mxu0 %v448
        %519 = vmatprep.subr.mxu0 0.0
        %520 = vmatpush1.msra.mxu0 %v449
        %521 = vmatprep.mubr.f32.mxu0 %v417
        %522 = vmatmul.mubr.f32.gmra.mrb[0].mxu0 %v416
        %v523 = vpop.f32.mrb[0].mxu0
        %v524 = vadd.f32 %v455, %v523
        %v525 = vpop.f32.mrb[0].mxu0
        %526 = vdwg.mxu0
        %v527 = vadd.f32 %v524, %v269
        %528 = vst [vmem:[%s268] sm:$0xff] %v527
        %s529 = sand.u32 %s141, 1
        %s530 = scalar_lea.sflag [#allocation4], %s529
        %s531 = sand.u32 %s141, 1
        %s532 = smul.addr %s531, 8
        %s533 = scalar_lea.vmem [#allocation8], %s532
        // Predicated region
        $region53: #{tpu_custom_call.1} parent=39 // pred_check
          %p534 = pneg %p151
        $region54: #{tpu_custom_call.1} parent=39 // pred_check_branch
          %536 = sbr.rel (%p534) target = $region56
        $region55: #{tpu_custom_call.1} parent=39 // pred_region
          %s538 = ssub.s32 128, 128
          %539 = vsyncadd %s530, %s538
          %s540 = smul.addr %s23, 128
          %s541 = scalar_lea.hbm %s5, %s540
          %s543 = sshll.u32 %s533, 4
          %s544 = int_to_ptr.vmem [resolvable:$true] %s543
          %546 = dma.vmem_to_hbm [thread:$0]  %s544, 128, %s541, %s530
        $region56: #{tpu_custom_call.1} parent=39 // pred_fallthru
          _
      $region40: #{tpu_custom_call.1} parent=5 // pred_fallthru
        _
      %p547 = scmp.le.s32.totalorder 2, %s18
      // Predicated region
      $region57: #{tpu_custom_call.1} parent=5 // pred_check
        %p548 = pneg %p547
      $region58: #{tpu_custom_call.1} parent=5 // pred_check_branch
        %550 = sbr.rel (%p548) target = $region60
      $region59: #{tpu_custom_call.1} parent=5 // pred_region
        %s551 = ssub.s32 %s18, 2
        // Predicated region
        $region61: #{tpu_custom_call.1} parent=59 // pred_check
          %p552 = pneg %p157
        $region62: #{tpu_custom_call.1} parent=59 // pred_check_branch
          %554 = sbr.rel (%p552) target = $region64
        $region63: #{tpu_custom_call.1} parent=59 // pred_region
          %s555 = sand.u32 %s142, 1
          %s556 = scalar_lea.sflag [#allocation4], %s555
          %s557 = sand.u32 %s142, 1
          %s558 = smul.addr %s557, 8
          %s559 = scalar_lea.vmem [#allocation8], %s558
          %560 = dma.done %s556, 128
        $region64: #{tpu_custom_call.1} parent=59 // pred_fallthru
          _
      $region60: #{tpu_custom_call.1} parent=5 // pred_fallthru
        _
    $region6: #{tpu_custom_call.1} parent=1 // loop_footer
      %s22 = sadd.s32 1, %s18
    $region7: #{tpu_custom_call.1} parent=1 // loop_footer_branch
      %17 = sbr.rel target = $region3
    $region8: #{tpu_custom_call.1} parent=1 // loop_exit
      _
    %561 = vsyncpa [#allocation3], 1
    %s562 = scalar_lea.sflag [#allocation3], 1
    %563 = vsyncpa %s562, 1
    %564 = vsyncpa [#allocation6], 1
    %565 = vsyncpa [#allocation4], 1
    %s566 = scalar_lea.sflag [#allocation4], 1
    %567 = vsyncpa %s566, 1

</llo_original>
